<compile_context>
chip_gen: v7x
topology: tpu7x:2x2x1
jax: 0.10.0
libtpu: 0.0.40
codegen_flags: <defaults>
</compile_context>

<pallas_src>
import jax
import jax.numpy as jnp
from jax import lax
from jax.experimental import pallas as pl
from jax.experimental.pallas import tpu as pltpu

LEAKY_SLOPE = 0.2
BN_EPS = 1e-5  # nn.BatchNorm2d default


# ----------------------------------------------------------------------------
# Kernels
# ----------------------------------------------------------------------------
def _conv_stats_kernel(x4_ref, wp_ref, sum_ref, sq_ref):
    """Pass 1: conv tile + accumulate per-(parity, channel) sum / sum-of-squares.

    x4_ref:  (4*Cin, S)      bf16  im2col taps of the ORIGINAL x, spatial on lanes
    wp_ref:  (4*Cout, 4*Cin) bf16  parity-combined weights
    sum_ref, sq_ref: (4*Cout, 1) f32 accumulators, resident across the whole grid
    """
    @pl.when((pl.program_id(0) == 0) & (pl.program_id(1) == 0))
    def _():
        sum_ref[...] = jnp.zeros_like(sum_ref)
        sq_ref[...] = jnp.zeros_like(sq_ref)

    y = jnp.dot(wp_ref[...], x4_ref[...],
                preferred_element_type=jnp.float32)        # (4*Cout, S) f32
    sum_ref[...] += jnp.sum(y, axis=1, keepdims=True)
    sq_ref[...] += jnp.sum(y * y, axis=1, keepdims=True)


def _conv_bn_lrelu_kernel(x4_ref, wp_ref, scale_ref, shift_ref, o_ref):
    """Pass 2: recompute conv tile, apply folded BN scale/shift + LeakyReLU."""
    y = jnp.dot(wp_ref[...], x4_ref[...],
                preferred_element_type=jnp.float32)        # (4*Cout, S) f32
    y = y * scale_ref[...] + shift_ref[...]                # folded BN affine (1 FMA)
    o_ref[...] = jnp.maximum(y, LEAKY_SLOPE * y)           # LeakyReLU(0.2)


# ----------------------------------------------------------------------------
# Wrapper
# ----------------------------------------------------------------------------
def _pick_spatial_tile(hw, target=8192):
    """Largest lane-tile: full H*W if small, else a multiple-of-128 divisor."""
    if hw <= target:
        return hw
    t = (target // 128) * 128
    while t >= 128:
        if hw % t == 0:
            return t
        t -= 128
    return hw  # no aligned divisor; fall back to the full spatial extent


def upsample_block_forward(x_nchw, w_oihw, bias, gamma, beta, *, s_tile=None):
    """Forward pass of UpsampleBlock. Input/output are NCHW like PyTorch."""
    del bias  # conv bias cancels exactly under BatchNorm's mean subtraction
    N, Cin, H, W = x_nchw.shape
    Cout = w_oihw.shape[0]
    HW = H * W
    K4, R4 = 4 * Cin, 4 * Cout

    if s_tile is None:
        s_tile = _pick_spatial_tile(HW)
    assert HW % s_tile == 0 and (s_tile % 128 == 0 or s_tile == HW), s_tile
    grid = (N, HW // s_tile)

    # ---- 4-tap im2col of the ORIGINAL x (small: 1/4 of the output spatially).
    # tap t = di*2+dj reads x[n, ci, i+di, j+dj]; zero pad after on H/W matches
    # PyTorch padding='same' for an even kernel (pad 0 before / 1 after).
    xp = jnp.pad(x_nchw, ((0, 0), (0, 0), (0, 1), (0, 1)))
    taps = [xp[:, :, di:di + H, dj:dj + W] for di in (0, 1) for dj in (0, 1)]
    x4 = jnp.concatenate(taps, axis=1).reshape(N, K4, HW).astype(jnp.bfloat16)

    # ---- parity-combined weights: row p*Cout+co (p = a*2+b output parity),
    #      column t*Cin+ci (t = source tap).  Nearest-x2 upsample + 2x2 conv
    #      collapses onto the original x with these tap coefficients.
    w = w_oihw.astype(jnp.float32)
    c00, c01 = w[:, :, 0, 0], w[:, :, 0, 1]
    c10, c11 = w[:, :, 1, 0], w[:, :, 1, 1]
    z = jnp.zeros_like(c00)
    wp = jnp.concatenate([
        jnp.concatenate([c00 + c01 + c10 + c11, z, z, z], axis=1),  # parity (0,0)
        jnp.concatenate([c00 + c10, c01 + c11, z, z], axis=1),      # parity (0,1)
        jnp.concatenate([c00 + c01, z, c10 + c11, z], axis=1),      # parity (1,0)
        jnp.concatenate([c00, c01, c10, c11], axis=1),              # parity (1,1)
    ], axis=0).astype(jnp.bfloat16)                                 # (4*Cout, 4*Cin)

    x4_spec = pl.BlockSpec((None, K4, s_tile), lambda n, s: (n, 0, s))
    wp_spec = pl.BlockSpec((R4, K4), lambda n, s: (0, 0))
    vec_spec = pl.BlockSpec((R4, 1), lambda n, s: (0, 0))

    # ---- pass 1: conv tiles -> per-(parity, channel) sum / sumsq (single pass).
    sums, sumsqs = pl.pallas_call(
        _conv_stats_kernel,
        grid=grid,
        in_specs=[x4_spec, wp_spec],
        out_specs=(vec_spec, vec_spec),
        out_shape=(jax.ShapeDtypeStruct((R4, 1), jnp.float32),
                   jax.ShapeDtypeStruct((R4, 1), jnp.float32)),
        compiler_params=pltpu.CompilerParams(
            dimension_semantics=("arbitrary", "arbitrary")),
    )(x4, wp)

    # ---- fold training-mode BN (biased batch stats) into one scale/shift per channel.
    count = jnp.float32(N * 4 * HW)                 # elements per channel = N*Hu*Wu
    mean = jnp.sum(sums.reshape(4, Cout), axis=0) / count
    ex2 = jnp.sum(sumsqs.reshape(4, Cout), axis=0) / count
    var = jnp.maximum(ex2 - mean * mean, 0.0)
    scale = gamma.astype(jnp.float32) * lax.rsqrt(var + BN_EPS)
    shift = beta.astype(jnp.float32) - mean * scale
    scale4 = jnp.tile(scale, 4).reshape(R4, 1)      # broadcast to all 4 parities
    shift4 = jnp.tile(shift, 4).reshape(R4, 1)

    # ---- pass 2: recompute conv tiles (x4 is small), apply scale/shift + LeakyReLU.
    yout = pl.pallas_call(
        _conv_bn_lrelu_kernel,
        grid=grid,
        in_specs=[x4_spec, wp_spec, vec_spec, vec_spec],
        out_specs=pl.BlockSpec((None, R4, s_tile), lambda n, s: (n, 0, s)),
        out_shape=jax.ShapeDtypeStruct((N, R4, HW), jnp.float32),
        compiler_params=pltpu.CompilerParams(
            dimension_semantics=("parallel", "parallel")),
    )(x4, wp, scale4, shift4)

    # ---- un-interleave the parity planes straight into NCHW (single output-sized
    #      relayout done by XLA outside the kernel).
    out = yout.reshape(N, 2, 2, Cout, H, W)          # (n, a, b, co, i, j)
    out = jnp.transpose(out, (0, 3, 4, 1, 5, 2))     # (n, co, i, a, j, b)
    return out.reshape(N, Cout, 2 * H, 2 * W)


# ----------------------------------------------------------------------------
# Pure-JAX reference mirroring the PyTorch forward (NCHW)
# ----------------------------------------------------------------------------
def _reference(x_nchw, w_oihw, bias, gamma, beta):
    x_up = jnp.repeat(jnp.repeat(x_nchw, 2, axis=2), 2, axis=3)
    y = lax.conv_general_dilated(
        x_up, w_oihw, window_strides=(1, 1), padding=((0, 1), (0, 1)),
        dimension_numbers=("NCHW", "OIHW", "NCHW"),
        precision=lax.Precision.HIGHEST)
    y = y + bias.reshape(1, -1, 1, 1)
    mean = jnp.mean(y, axis=(0, 2, 3), keepdims=True)
    var = jnp.mean((y - mean) ** 2, axis=(0, 2, 3), keepdims=True)
    y = (y - mean) / jnp.sqrt(var + BN_EPS)
    y = y * gamma.reshape(1, -1, 1, 1) + beta.reshape(1, -1, 1, 1)
    return jnp.where(y > 0, y, LEAKY_SLOPE * y)


if __name__ == "__main__":
    key = jax.random.PRNGKey(0)
    k_x, k_w, k_b = jax.random.split(key, 3)

    N, C_IN, H, W = 2, 4, 16, 16
    C_OUT = 8

    x = jax.random.normal(k_x, (N, C_IN, H, W), dtype=jnp.float32)

    # Conv2d(C_IN, C_OUT, kernel_size=2): weight (C_OUT, C_IN, 2, 2), bias (C_OUT,)
    fan_in = C_IN * 2 * 2
    bound = 1.0 / jnp.sqrt(float(fan_in))
    w = jax.random.uniform(k_w, (C_OUT, C_IN, 2, 2), jnp.float32, -bound, bound)
    b = jax.random.uniform(k_b, (C_OUT,), jnp.float32, -bound, bound)
    # BatchNorm2d defaults: weight (gamma) = 1, bias (beta) = 0
    gamma = jnp.ones((C_OUT,), jnp.float32)
    beta = jnp.zeros((C_OUT,), jnp.float32)

    # TODO(synk): BatchNorm2d running_mean/running_var buffer updates (a training
    # side effect) are not modeled; the forward output does not depend on them.

    # s_tile=128 -> grid (2, 2): exercises the multi-step resident stats accumulator.
    out = upsample_block_forward(x, w, b, gamma, beta, s_tile=128)
    out = jax.block_until_ready(out)

    ref = _reference(x, w, b, gamma, beta)
    assert out.shape == (N, C_OUT, 2 * H, 2 * W), out.shape
    max_err = float(jnp.max(jnp.abs(out - ref)))
    assert jnp.allclose(out, ref, rtol=2e-2, atol=2e-2), max_err  # bf16 matmul path

    print("KERNEL_OK")
</pallas_src>

<mosaic_0001>
module attributes {stable_mosaic.version = 11 : i64} {
  func.func @_conv_stats_kernel(%arg0: i32, %arg1: i32, %arg2: memref<1x16x128xbf16, #tpu.memory_space<vmem>>, %arg3: memref<32x16xbf16, #tpu.memory_space<vmem>>, %arg4: memref<32x1xf32, #tpu.memory_space<vmem>>, %arg5: memref<32x1xf32, #tpu.memory_space<vmem>>) attributes {dimension_semantics = [#tpu.dimension_semantics<arbitrary>, #tpu.dimension_semantics<arbitrary>], iteration_bounds = array<i64: 2, 2>, scalar_prefetch = 0 : i64, scratch_operands = 0 : i64, tpu.core_type = #tpu.core_type<tc>, window_params = [{transform_indices = @transform_0, window_bounds = array<i64: 1, 16, 128>}, {pipeline_mode = #tpu.pipeline_mode<synchronous>, transform_indices = @transform_1, window_bounds = array<i64: 32, 16>}, {pipeline_mode = #tpu.pipeline_mode<synchronous>, transform_indices = @transform_2, window_bounds = array<i64: 32, 1>}, {pipeline_mode = #tpu.pipeline_mode<synchronous>, transform_indices = @transform_3, window_bounds = array<i64: 32, 1>}]} {
    %c0_i32 = arith.constant 0 : i32
    %0 = arith.cmpi eq, %arg0, %c0_i32 : i32
    %c0_i32_0 = arith.constant 0 : i32
    %1 = arith.cmpi eq, %arg1, %c0_i32_0 : i32
    %2 = arith.andi %0, %1 : i1
    %3 = arith.extui %2 : i1 to i32
    %c0_i32_1 = arith.constant 0 : i32
    %4 = arith.cmpi ne, %3, %c0_i32_1 : i32
    scf.if %4 {
      %cst_16 = arith.constant 0.000000e+00 : f32
      %20 = vector.broadcast %cst_16 : f32 to vector<32x1xf32>
      %c0_17 = arith.constant 0 : index
      %c0_18 = arith.constant 0 : index
      %21 = vector.load %arg4[%c0_17, %c0_18] : memref<32x1xf32, #tpu.memory_space<vmem>>, vector<32x1xf32>
      tpu.vector_store %arg4[%c0_17, %c0_18], %20 {strides = array<i32>} : memref<32x1xf32, #tpu.memory_space<vmem>>, vector<32x1xf32>,
      %cst_19 = arith.constant 0.000000e+00 : f32
      %22 = vector.broadcast %cst_19 : f32 to vector<32x1xf32>
      %c0_20 = arith.constant 0 : index
      %c0_21 = arith.constant 0 : index
      %23 = vector.load %arg5[%c0_20, %c0_21] : memref<32x1xf32, #tpu.memory_space<vmem>>, vector<32x1xf32>
      tpu.vector_store %arg5[%c0_20, %c0_21], %22 {strides = array<i32>} : memref<32x1xf32, #tpu.memory_space<vmem>>, vector<32x1xf32>,
    } else {
    }
    %c0 = arith.constant 0 : index
    %c0_2 = arith.constant 0 : index
    %5 = vector.load %arg3[%c0, %c0_2] : memref<32x16xbf16, #tpu.memory_space<vmem>>, vector<32x16xbf16>
    %c0_3 = arith.constant 0 : index
    %c0_4 = arith.constant 0 : index
    %c0_5 = arith.constant 0 : index
    %6 = vector.load %arg2[%c0_3, %c0_4, %c0_5] : memref<1x16x128xbf16, #tpu.memory_space<vmem>>, vector<1x16x128xbf16>
    %7 = vector.shape_cast %6 : vector<1x16x128xbf16> to vector<16x128xbf16>
    %cst = arith.constant dense<0.000000e+00> : vector<32x128xf32>
    %8 = tpu.matmul %5, %7, %cst {dimension_numbers = #tpu.dot_dimension_numbers<[1], [0], [0], [1], [0, 0, 1, 1], [], []>} : vector<32x16xbf16>, vector<16x128xbf16>, vector<32x128xf32> -> vector<32x128xf32>
    %c0_6 = arith.constant 0 : index
    %c0_7 = arith.constant 0 : index
    %9 = vector.load %arg4[%c0_6, %c0_7] : memref<32x1xf32, #tpu.memory_space<vmem>>, vector<32x1xf32>
    %cst_8 = arith.constant dense<0.000000e+00> : vector<32xf32>
    %10 = vector.multi_reduction <add>, %8, %cst_8 [1] : vector<32x128xf32> to vector<32xf32>
    %11 = vector.shape_cast %10 : vector<32xf32> to vector<32x1xf32>
    %12 = arith.addf %9, %11 : vector<32x1xf32>
    %c0_9 = arith.constant 0 : index
    %c0_10 = arith.constant 0 : index
    %13 = vector.load %arg4[%c0_9, %c0_10] : memref<32x1xf32, #tpu.memory_space<vmem>>, vector<32x1xf32>
    tpu.vector_store %arg4[%c0_9, %c0_10], %12 {strides = array<i32>} : memref<32x1xf32, #tpu.memory_space<vmem>>, vector<32x1xf32>,
    %c0_11 = arith.constant 0 : index
    %c0_12 = arith.constant 0 : index
    %14 = vector.load %arg5[%c0_11, %c0_12] : memref<32x1xf32, #tpu.memory_space<vmem>>, vector<32x1xf32>
    %15 = arith.mulf %8, %8 : vector<32x128xf32>
    %cst_13 = arith.constant dense<0.000000e+00> : vector<32xf32>
    %16 = vector.multi_reduction <add>, %15, %cst_13 [1] : vector<32x128xf32> to vector<32xf32>
    %17 = vector.shape_cast %16 : vector<32xf32> to vector<32x1xf32>
    %18 = arith.addf %14, %17 : vector<32x1xf32>
    %c0_14 = arith.constant 0 : index
    %c0_15 = arith.constant 0 : index
    %19 = vector.load %arg5[%c0_14, %c0_15] : memref<32x1xf32, #tpu.memory_space<vmem>>, vector<32x1xf32>
    tpu.vector_store %arg5[%c0_14, %c0_15], %18 {strides = array<i32>} : memref<32x1xf32, #tpu.memory_space<vmem>>, vector<32x1xf32>,
    return
  }
  func.func @transform_0(%arg0: i32, %arg1: i32) -> (i32, i32, i32) {
    %c0_i32 = arith.constant 0 : i32
    %c0_i32_0 = arith.constant 0 : i32
    return %arg0, %c0_i32, %arg1 : i32, i32, i32
  }
  func.func @transform_1(%arg0: i32, %arg1: i32) -> (i32, i32) {
    %c0_i32 = arith.constant 0 : i32
    %c0_i32_0 = arith.constant 0 : i32
    %c0_i32_1 = arith.constant 0 : i32
    return %c0_i32, %c0_i32_0 : i32, i32
  }
  func.func @transform_2(%arg0: i32, %arg1: i32) -> (i32, i32) {
    %c0_i32 = arith.constant 0 : i32
    %c0_i32_0 = arith.constant 0 : i32
    %c0_i32_1 = arith.constant 0 : i32
    return %c0_i32, %c0_i32_0 : i32, i32
  }
  func.func @transform_3(%arg0: i32, %arg1: i32) -> (i32, i32) {
    %c0_i32 = arith.constant 0 : i32
    %c0_i32_0 = arith.constant 0 : i32
    %c0_i32_1 = arith.constant 0 : i32
    return %c0_i32, %c0_i32_0 : i32, i32
  }
}

</mosaic_0001>

<llo_original>
// kernel: tpu_custom_call.1
$region0: #{tpu_custom_call.1}
  #allocation0 [shape = 'u32[]', space=smem, size = 0x4, offset = 0x4, fixed_abs, tag = 'smem constant byte address 0x4 - core index']
  #allocation1 [shape = 'u32[144,128]{1,0:T(1,128)}', space=vmem, size = 0x12000, scoped, tag = 'internal scratch']
  %s0 = inlined_call_operand.hbm [shape: bf16[2,16,256], index: 0, kind: input, shape index: {}]
  %s1 = inlined_call_operand.vmem [shape: bf16[32,16], index: 1, kind: input, shape index: {}]
  %s2 = inlined_call_operand.vmem [shape: f32[32,1], index: 2, kind: output, shape index: {0}]
  %s3 = inlined_call_operand.vmem [shape: f32[32,1], index: 3, kind: output, shape index: {1}]
  %4 = xla_tuple %s2, %s3
  %s5 = sld [smem:[#allocation0]]
  $region57: #{tpu_custom_call.1} parent=0
    _
  %s7 = ssub.s32 1, %s5
  %s8 = scalar_select 0, %s7, %s5
  $region1: #{tpu_custom_call.1} parent=0
    #allocation2 [shape = 'u8[8192]{0}', space=vmem, size = 0x2000, scoped, tag = 'input window, operand 0']
    #allocation3 [shape = 's32[2]{0}', space=sflag, size = 0x8, scoped, tag = 'scoped memory for tpu_custom_call.1']
    %9 = vsyncpa [#allocation3], 0
    %s10 = scalar_lea.sflag [#allocation3], 1
    %11 = vsyncpa %s10, 0
    loop: start=0, step=1, limit=6
    $region2: #{tpu_custom_call.1} parent=1 // loop_pre_header
      _
    $region3: #{tpu_custom_call.1} parent=1 // loop_header
      %s13 = sphi 0, %s17
      %p14 = scmp.ge.s32.totalorder %s13, 6
      %s20 = sphi 0, %s32
      %s21 = sphi 0, %s28
      %s22 = sphi 0, %s20
      %s23 = sphi 0, %s21
      %s24 = sphi 0, %s22
      %s25 = sphi 0, %s23
      %s37 = sphi 0, %s39
      %s40 = sphi 0, %s37
      %s41 = sphi 0, %s40
      %s57 = sphi 0, %s41
      %s61 = sphi 0, %s61
      %s63 = sphi 0, %s61
      %s64 = sphi 0, %s63
      %s78 = sphi 0, %s64
      %s82 = sphi 0, %s82
      %s84 = sphi 0, %s82
      %s85 = sphi 0, %s84
      %s99 = sphi 0, %s85
      %s103 = sphi 0, %s103
      %s105 = sphi 0, %s103
      %s106 = sphi 0, %s105
      %s120 = sphi 0, %s106
    $region4: #{tpu_custom_call.1} parent=1 // loop_header_branch
      %16 = sbr.rel (%p14) target = $region8
    $region5: #{tpu_custom_call.1} parent=1 // loop_body
      %s18 = ssub.s32 %s13, 1
      %s19 = ssub.s32 %s13, 2
      %s26 = sadd.s32 1, %s21
      %p27 = scmp.ge.s32.totalorder %s26, 2
      %s28 = scalar_select %p27, 0, %s26
      %s29 = sadd.s32 1, %s20
      %s30 = scalar_select %p27, %s29, %s20
      %p31 = scmp.ge.s32.totalorder %s30, 2
      %s32 = scalar_select %p31, 0, %s30
      %s33 = ssub.s32 %s20, %s32
      %s34 = ssub.s32 %s21, %s28
      %s35 = sor.u32 %s33, %s34
      %p36 = scmp.eq.s32.totalorder %s35, 0
      %s38 = sadd.s32 %s37, 1
      %s39 = scalar_select %p36, %s37, %s38
      %p42 = pneg %p36
      %p43 = scmp.eq.s32.totalorder %s13, 3
      %p44 = por %p42, %p43
      %p45 = scmp.ne.s32.totalorder %s37, %s40
      %p46 = scmp.eq.s32.totalorder %s13, 0
      %p47 = por %p45, %p46
      %p48 = scmp.ne.s32.totalorder %s37, %s40
      %p49 = scmp.eq.s32.totalorder %s18, 3
      %p50 = por %p48, %p49
      %p51 = scmp.ne.s32.totalorder %s40, %s41
      %p52 = scmp.eq.s32.totalorder %s18, 0
      %p53 = por %p51, %p52
      %p54 = scmp.ne.s32.totalorder %s40, %s41
      %p55 = scmp.eq.s32.totalorder %s19, 3
      %p56 = por %p54, %p55
      %p58 = scmp.ne.s32.totalorder %s41, %s57
      %p59 = scmp.eq.s32.totalorder %s19, 0
      %p60 = por %p58, %p59
      %s62 = sadd.s32 %s61, 1
      %p65 = scmp.eq.s32.totalorder %s13, 3
      %p66 = scmp.ne.s32.totalorder %s61, %s63
      %p67 = scmp.eq.s32.totalorder %s13, 0
      %p68 = por %p66, %p67
      %p69 = scmp.ne.s32.totalorder %s61, %s63
      %p70 = scmp.eq.s32.totalorder %s18, 3
      %p71 = por %p69, %p70
      %p72 = scmp.ne.s32.totalorder %s63, %s64
      %p73 = scmp.eq.s32.totalorder %s18, 0
      %p74 = por %p72, %p73
      %p75 = scmp.ne.s32.totalorder %s63, %s64
      %p76 = scmp.eq.s32.totalorder %s19, 3
      %p77 = por %p75, %p76
      %p79 = scmp.ne.s32.totalorder %s64, %s78
      %p80 = scmp.eq.s32.totalorder %s19, 0
      %p81 = por %p79, %p80
      %s83 = sadd.s32 %s82, 1
      %p86 = scmp.eq.s32.totalorder %s13, 3
      %p87 = scmp.ne.s32.totalorder %s82, %s84
      %p88 = scmp.eq.s32.totalorder %s13, 0
      %p89 = por %p87, %p88
      %p90 = scmp.ne.s32.totalorder %s82, %s84
      %p91 = scmp.eq.s32.totalorder %s18, 3
      %p92 = por %p90, %p91
      %p93 = scmp.ne.s32.totalorder %s84, %s85
      %p94 = scmp.eq.s32.totalorder %s18, 0
      %p95 = por %p93, %p94
      %p96 = scmp.ne.s32.totalorder %s84, %s85
      %p97 = scmp.eq.s32.totalorder %s19, 3
      %p98 = por %p96, %p97
      %p100 = scmp.ne.s32.totalorder %s85, %s99
      %p101 = scmp.eq.s32.totalorder %s19, 0
      %p102 = por %p100, %p101
      %s104 = sadd.s32 %s103, 1
      %p107 = scmp.eq.s32.totalorder %s13, 3
      %p108 = scmp.ne.s32.totalorder %s103, %s105
      %p109 = scmp.eq.s32.totalorder %s13, 0
      %p110 = por %p108, %p109
      %p111 = scmp.ne.s32.totalorder %s103, %s105
      %p112 = scmp.eq.s32.totalorder %s18, 3
      %p113 = por %p111, %p112
      %p114 = scmp.ne.s32.totalorder %s105, %s106
      %p115 = scmp.eq.s32.totalorder %s18, 0
      %p116 = por %p114, %p115
      %p117 = scmp.ne.s32.totalorder %s105, %s106
      %p118 = scmp.eq.s32.totalorder %s19, 3
      %p119 = por %p117, %p118
      %p121 = scmp.ne.s32.totalorder %s106, %s120
      %p122 = scmp.eq.s32.totalorder %s19, 0
      %p123 = por %p121, %p122
      %p124 = scmp.le.s32.totalorder 1, %s13
      %p125 = scmp.lt.s32.totalorder %s13, 5
      %p126 = pnand %p124, %p125
      %p127 = pneg %p126
      // Predicated region
      $region9: #{tpu_custom_call.1} parent=5 // pred_check
        _
      $region10: #{tpu_custom_call.1} parent=5 // pred_check_branch
        %129 = sbr.rel (%p126) target = $region12
      $region11: #{tpu_custom_call.1} parent=5 // pred_region
        %s130 = ssub.s32 %s13, 1
        // Predicated region
        $region13: #{tpu_custom_call.1} parent=11 // pred_check
          %p131 = pneg %p74
        $region14: #{tpu_custom_call.1} parent=11 // pred_check_branch
          %133 = sbr.rel (%p131) target = $region16
        $region15: #{tpu_custom_call.1} parent=11 // pred_region
          _
        $region16: #{tpu_custom_call.1} parent=11 // pred_fallthru
          _
      $region12: #{tpu_custom_call.1} parent=5 // pred_fallthru
        _
      %p134 = scmp.lt.s32.totalorder %s13, 4
      // Predicated region
      $region17: #{tpu_custom_call.1} parent=5 // pred_check
        %p135 = pneg %p134
      $region18: #{tpu_custom_call.1} parent=5 // pred_check_branch
        %137 = sbr.rel (%p135) target = $region20
      $region19: #{tpu_custom_call.1} parent=5 // pred_region
        // Predicated region
        $region21: #{tpu_custom_call.1} parent=19 // pred_check
          %p138 = pneg %p47
        $region22: #{tpu_custom_call.1} parent=19 // pred_check_branch
          %140 = sbr.rel (%p138) target = $region24
        $region23: #{tpu_custom_call.1} parent=19 // pred_region
          %s141 = sand.u32 %s37, 1
          %s142 = scalar_lea.sflag [#allocation3], %s141
          %s143 = sand.u32 %s37, 1
          %s144 = smul.addr %s143, 8
          %s145 = scalar_lea.vmem [#allocation2], %s144
          %s147 = ssub.s32 128, 128
          %148 = vsyncadd %s142, %s147
          %s149 = smul.addr %s20, 4
          %s150 = sadd.s32 %s21, %s149
          %s151 = smul.addr %s150, 64
          %s152 = scalar_lea.hbm %s0, %s151
          %s153 = sshll.u32 %s145, 4
          %s154 = int_to_ptr.vmem [resolvable:$true] %s153
          %159 = dma.hbm_to_vmem [thread:$0]  %s152, 128, %s154, %s142, 128, 64, 4
        $region24: #{tpu_custom_call.1} parent=19 // pred_fallthru
          _
      $region20: #{tpu_custom_call.1} parent=5 // pred_fallthru
        _
      %p160 = scmp.le.s32.totalorder 1, %s13
      %p161 = scmp.lt.s32.totalorder %s13, 5
      %p162 = pnand %p160, %p161
      %p163 = pneg %p162
      // Predicated region
      $region25: #{tpu_custom_call.1} parent=5 // pred_check
        _
      $region26: #{tpu_custom_call.1} parent=5 // pred_check_branch
        %165 = sbr.rel (%p162) target = $region28
      $region27: #{tpu_custom_call.1} parent=5 // pred_region
        %s166 = ssub.s32 %s13, 1
        %s167 = sand.u32 %s40, 1
        %s168 = scalar_lea.sflag [#allocation3], %s167
        %s169 = sand.u32 %s40, 1
        %s170 = smul.addr %s169, 8
        %s171 = scalar_lea.vmem [#allocation2], %s170
        // Predicated region
        $region29: #{tpu_custom_call.1} parent=27 // pred_check
          %p172 = pneg %p53
        $region30: #{tpu_custom_call.1} parent=27 // pred_check_branch
          %174 = sbr.rel (%p172) target = $region32
        $region31: #{tpu_custom_call.1} parent=27 // pred_region
          %175 = dma.done %s168, 128
        $region32: #{tpu_custom_call.1} parent=27 // pred_fallthru
          _
        %s176 = sand.u32 %s40, 1
        %s177 = scalar_lea.sflag [#allocation3], %s176
        %s178 = sand.u32 %s40, 1
        %s179 = smul.addr %s178, 8
        %s180 = scalar_lea.vmem [#allocation2], %s179
        %p181 = pneg %p53
        %p182 = pneg %p50
        %p183 = pneg %p74
        %p184 = pneg %p71
        %p185 = pneg %p95
        %p186 = pneg %p92
        %p187 = pneg %p116
        %p188 = pneg %p113
        %p190 = scmp.eq.s32.totalorder %s22, 0
        %p191 = scmp.eq.s32.totalorder %s23, 0
        %p192 = pnand %p190, %p191
        %p193 = pneg %p192
        // Predicated region
        $region33: #{tpu_custom_call.1} parent=27 // pred_check
          _
        $region34: #{tpu_custom_call.1} parent=27 // pred_check_branch
          %195 = sbr.rel (%p192) target = $region36
        $region35: #{tpu_custom_call.1} parent=27 // pred_region
          %vm196 = vcmask 7168
          %197 = vst.msk [vmem:[%s2] sm:$0xff] %vm196, 0.0
          %198 = vst.msk [vmem:[%s2 + $0x8] sm:$0xff] %vm196, 0.0
          %199 = vst.msk [vmem:[%s2 + $0x10] sm:$0xff] %vm196, 0.0
          %200 = vst.msk [vmem:[%s2 + $0x18] sm:$0xff] %vm196, 0.0
          %201 = vst.msk [vmem:[%s3] sm:$0xff] %vm196, 0.0
          %202 = vst.msk [vmem:[%s3 + $0x8] sm:$0xff] %vm196, 0.0
          %203 = vst.msk [vmem:[%s3 + $0x10] sm:$0xff] %vm196, 0.0
          %204 = vst.msk [vmem:[%s3 + $0x18] sm:$0xff] %vm196, 0.0
        $region36: #{tpu_custom_call.1} parent=27 // pred_fallthru
          _
        %v205 = vld [vmem:[%s1] sm:$0xf]
        %v206 = vld [vmem:[%s1 + $0x4] sm:$0xf]
        %v207 = vld [vmem:[%s1 + $0x8] sm:$0xf]
        %v208 = vld [vmem:[%s1 + $0xc] sm:$0xf]
        %v209 = vld [vmem:[%s171] sm:$0xf]
        %v210 = vld [vmem:[%s171 + $0x4] sm:$0xf]
        %v215 = vunpack.c.l.b16 %v205
        %v216 = vunpack.c.l.b16 %v206
        %v217 = vunpack.c.l.b16 %v207
        %v218 = vunpack.c.l.b16 %v208
        %v219 = vpack.c.b16 %v216, %v215
        %v220 = vpack.c.b16 %v218, %v217
        %v223 = vunpack.c.l.b16 %v209
        %v224 = vunpack.c.l.b16 %v210
        %v225 = vpack.c.b16 %v224, %v223
        %vm227 = vcmask 130048
        %v229 = vsel %vm227, %v219, 0
        %v232 = vsel %vm227, %v220, 0
        %234 = vmatprep.subr.bf16.mxu0 0
        %235 = vmatpush1.bf16.msra.mxu0 %v225
        %236 = vmatprep.subr.bf16.mxu0 0
        %237 = vmatpush1.bf16.msra.mxu0 0
        %238 = vmatprep.subr.bf16.mxu0 0
        %239 = vmatpush1.bf16.msra.mxu0 0
        %240 = vmatprep.subr.bf16.mxu0 0
        %241 = vmatpush1.bf16.msra.mxu0 0
        %242 = vmatprep.subr.bf16.mxu0 0
        %243 = vmatpush1.bf16.msra.mxu0 0
        %244 = vmatprep.subr.bf16.mxu0 0
        %245 = vmatpush1.bf16.msra.mxu0 0
        %246 = vmatprep.subr.bf16.mxu0 0
        %247 = vmatpush1.bf16.msra.mxu0 0
        %248 = vmatprep.subr.bf16.mxu0 0
        %249 = vmatpush1.bf16.msra.mxu0 0
        %250 = vmatprep.subr.bf16.mxu0 0
        %251 = vmatpush1.bf16.msra.mxu0 0
        %252 = vmatprep.subr.bf16.mxu0 0
        %253 = vmatpush1.bf16.msra.mxu0 0
        %254 = vmatprep.subr.bf16.mxu0 0
        %255 = vmatpush1.bf16.msra.mxu0 0
        %256 = vmatprep.subr.bf16.mxu0 0
        %257 = vmatpush1.bf16.msra.mxu0 0
        %258 = vmatprep.subr.bf16.mxu0 0
        %259 = vmatpush1.bf16.msra.mxu0 0
        %260 = vmatprep.subr.bf16.mxu0 0
        %261 = vmatpush1.bf16.msra.mxu0 0
        %262 = vmatprep.subr.bf16.mxu0 0
        %263 = vmatpush1.bf16.msra.mxu0 0
        %264 = vmatprep.subr.bf16.mxu0 0
        %265 = vmatpush1.bf16.msra.mxu0 0
        %266 = vmatprep.mubr.bf16.mxu0 0
        %267 = vmatmul.mubr.bf16.gmra.mrb[0].mxu0 %v229
        %v268 = vpop.f32.mrb[0].mxu0
        %v269 = vadd.f32 0.0, %v268
        %v270 = vpop.f32.mrb[0].mxu0
        %v271 = vpop.f32.mrb[0].mxu0
        %v272 = vadd.f32 0.0, %v271
        %v273 = vpop.f32.mrb[0].mxu0
        %274 = vmatprep.mubr.bf16.mxu0 0
        %275 = vmatmul.mubr.bf16.gmra.mrb[0].mxu0 %v232
        %v276 = vpop.f32.mrb[0].mxu0
        %v277 = vadd.f32 0.0, %v276
        %v278 = vpop.f32.mrb[0].mxu0
        %v279 = vpop.f32.mrb[0].mxu0
        %v280 = vadd.f32 0.0, %v279
        %v281 = vpop.f32.mrb[0].mxu0
        %282 = vdwg.mxu0
        %v283 = vld [vmem:[%s2] sm:$0xff]
        %v284 = vld [vmem:[%s2 + $0x8] sm:$0xff]
        %v285 = vld [vmem:[%s2 + $0x10] sm:$0xff]
        %v286 = vld [vmem:[%s2 + $0x18] sm:$0xff]
        %287 = vadd.xlane.f32.xlu0 %v269
        %v288 = vpop.xlane.xlu0 %287
        %289 = vadd.xlane.f32.xlu0 %v272
        %v290 = vpop.xlane.xlu0 %289
        %291 = vadd.xlane.f32.xlu0 %v277
        %v292 = vpop.xlane.xlu0 %291
        %293 = vadd.xlane.f32.xlu0 %v280
        %v294 = vpop.xlane.xlu0 %293
        %v295 = vadd.f32 %v283, %v288
        %v296 = vadd.f32 %v284, %v290
        %v297 = vadd.f32 %v285, %v292
        %v298 = vadd.f32 %v286, %v294
        %vm299 = vcmask 7168
        %300 = vst.msk [vmem:[%s2] sm:$0xff] %vm299, %v295
        %301 = vst.msk [vmem:[%s2 + $0x8] sm:$0xff] %vm299, %v296
        %302 = vst.msk [vmem:[%s2 + $0x10] sm:$0xff] %vm299, %v297
        %303 = vst.msk [vmem:[%s2 + $0x18] sm:$0xff] %vm299, %v298
        %v304 = vld [vmem:[%s3] sm:$0xff]
        %v305 = vld [vmem:[%s3 + $0x8] sm:$0xff]
        %v306 = vld [vmem:[%s3 + $0x10] sm:$0xff]
        %v307 = vld [vmem:[%s3 + $0x18] sm:$0xff]
        %v308 = vmul.f32 %v269, %v269
        %v309 = vmul.f32 %v272, %v272
        %v310 = vmul.f32 %v277, %v277
        %v311 = vmul.f32 %v280, %v280
        %312 = vadd.xlane.f32.xlu0 %v308
        %v313 = vpop.xlane.xlu0 %312
        %314 = vadd.xlane.f32.xlu0 %v309
        %v315 = vpop.xlane.xlu0 %314
        %316 = vadd.xlane.f32.xlu0 %v310
        %v317 = vpop.xlane.xlu0 %316
        %318 = vadd.xlane.f32.xlu0 %v311
        %v319 = vpop.xlane.xlu0 %318
        %v320 = vadd.f32 %v304, %v313
        %v321 = vadd.f32 %v305, %v315
        %v322 = vadd.f32 %v306, %v317
        %v323 = vadd.f32 %v307, %v319
        %324 = vst.msk [vmem:[%s3] sm:$0xff] %vm299, %v320
        %325 = vst.msk [vmem:[%s3 + $0x8] sm:$0xff] %vm299, %v321
        %326 = vst.msk [vmem:[%s3 + $0x10] sm:$0xff] %vm299, %v322
        %327 = vst.msk [vmem:[%s3 + $0x18] sm:$0xff] %vm299, %v323
        // Predicated region
        $region37: #{tpu_custom_call.1} parent=27 // pred_check
          %p328 = pneg %p92
        $region38: #{tpu_custom_call.1} parent=27 // pred_check_branch
          %330 = sbr.rel (%p328) target = $region40
        $region39: #{tpu_custom_call.1} parent=27 // pred_region
          _
        $region40: #{tpu_custom_call.1} parent=27 // pred_fallthru
          _
        // Predicated region
        $region41: #{tpu_custom_call.1} parent=27 // pred_check
          %p331 = pneg %p113
        $region42: #{tpu_custom_call.1} parent=27 // pred_check_branch
          %333 = sbr.rel (%p331) target = $region44
        $region43: #{tpu_custom_call.1} parent=27 // pred_region
          _
        $region44: #{tpu_custom_call.1} parent=27 // pred_fallthru
          _
        // Predicated region
        $region45: #{tpu_custom_call.1} parent=27 // pred_check
          %p334 = pneg %p92
        $region46: #{tpu_custom_call.1} parent=27 // pred_check_branch
          %336 = sbr.rel (%p334) target = $region48
        $region47: #{tpu_custom_call.1} parent=27 // pred_region
          _
        $region48: #{tpu_custom_call.1} parent=27 // pred_fallthru
          _
        // Predicated region
        $region49: #{tpu_custom_call.1} parent=27 // pred_check
          %p337 = pneg %p113
        $region50: #{tpu_custom_call.1} parent=27 // pred_check_branch
          %339 = sbr.rel (%p337) target = $region52
        $region51: #{tpu_custom_call.1} parent=27 // pred_region
          _
        $region52: #{tpu_custom_call.1} parent=27 // pred_fallthru
          _
      $region28: #{tpu_custom_call.1} parent=5 // pred_fallthru
        _
      %p340 = scmp.le.s32.totalorder 2, %s13
      // Predicated region
      $region53: #{tpu_custom_call.1} parent=5 // pred_check
        %p341 = pneg %p340
      $region54: #{tpu_custom_call.1} parent=5 // pred_check_branch
        %343 = sbr.rel (%p341) target = $region56
      $region55: #{tpu_custom_call.1} parent=5 // pred_region
        %s344 = ssub.s32 %s13, 2
      $region56: #{tpu_custom_call.1} parent=5 // pred_fallthru
        _
    $region6: #{tpu_custom_call.1} parent=1 // loop_footer
      %s17 = sadd.s32 1, %s13
    $region7: #{tpu_custom_call.1} parent=1 // loop_footer_branch
      %12 = sbr.rel target = $region3
    $region8: #{tpu_custom_call.1} parent=1 // loop_exit
      _
    %345 = vsyncpa [#allocation3], 1
    %s346 = scalar_lea.sflag [#allocation3], 1
    %347 = vsyncpa %s346, 1

</llo_original>
